<compile_context>
chip_gen: v7x
topology: tpu7x:2x2x1
jax: 0.10.0
libtpu: 0.0.40
codegen_flags: <defaults>
</compile_context>

<pallas_src>
import functools

import jax
import jax.numpy as jnp
from jax.experimental import pallas as pl
from jax.experimental.pallas import tpu as pltpu

# Synthetic problem sizes (small, consistent with an image->AU-score pipeline).
B = 2            # batch
C = 3            # RGB channels
H = W = 16       # spatial
D = C * H * W    # flattened feature dim = 768 (= 6 * 128, lane-dense)
NUM_AU = 12      # number of action-unit scores emitted by the AU head
N_PAD = 128      # AU columns padded to a full lane width

IMAGENET_MEAN = (0.485, 0.456, 0.406)
IMAGENET_STD = (0.229, 0.224, 0.225)


def au_loss_kernel(src_ref, gen_ref, w_ref, b_ref, out_ref, *, num_au):
    """Single grid point, everything resident in VMEM.

    src_ref : (B, D)      bfloat16  flattened (channel-major NCHW) src images
    gen_ref : (B, D)      bfloat16  flattened gen images
    w_ref   : (D, N_PAD)  bfloat16  folded AU-head weight (normalize pre-applied)
    b_ref   : (1, N_PAD)  float32   folded AU-head bias
    out_ref : (1, 1)      float32   scalar L1 loss (mean reduction), in SMEM
    """
    b_rows = src_ref.shape[0]  # static

    w = w_ref[...]
    bias = b_ref[...]

    # Folded normalize + AU-head stand-in: bf16 MXU matmuls, f32 accumulation,
    # sigmoid on the EUP.  Weight is loaded once and reused for both branches.
    src_scores = jax.nn.sigmoid(
        jnp.dot(src_ref[...], w, preferred_element_type=jnp.float32) + bias)
    gen_scores = jax.nn.sigmoid(
        jnp.dot(gen_ref[...], w, preferred_element_type=jnp.float32) + bias)

    # nn.L1Loss(reduction='mean') over the real num_au columns.  Padded columns
    # produce identical sigmoid values on both branches -> |diff| == 0 exactly,
    # so summing all N_PAD columns is exact; divide by B * num_au.
    diff = jnp.abs(src_scores - gen_scores)               # (B, N_PAD), whole-tile VPU
    out_ref[0, 0] = jnp.sum(diff) / (b_rows * num_au)


def prepare_au_head(w, bias, channels, height, width):
    """One-time (weight-load-time) fold of the frozen normalize into the frozen
    AU head.  Returns lane-padded, bf16-cast weight and f32 bias:

        ((x - mean)/std) @ w + b  ==  x @ (w * inv_std[:, None])
                                       + (b - (mean * inv_std) @ w)
    """
    d = channels * height * width
    num_au = w.shape[1]
    hw = height * width

    # Per-channel normalize constants broadcast to the channel-major flatten.
    mean_vec = jnp.repeat(jnp.asarray(IMAGENET_MEAN, jnp.float32)[:channels], hw)  # (D,)
    std_vec = jnp.repeat(jnp.asarray(IMAGENET_STD, jnp.float32)[:channels], hw)    # (D,)
    inv_std = 1.0 / std_vec

    # Zero-pad AU columns to a full lane width (unmasked vregs in the kernel).
    w_pad = jnp.zeros((d, N_PAD), jnp.float32).at[:, :num_au].set(w.astype(jnp.float32))
    b_pad = jnp.zeros((1, N_PAD), jnp.float32).at[:, :num_au].set(bias.astype(jnp.float32))

    w_fold = (w_pad * inv_std[:, None]).astype(jnp.bfloat16)          # (D, N_PAD) bf16
    b_fold = b_pad - (mean_vec * inv_std)[None, :] @ w_pad            # (1, N_PAD) f32
    return w_fold, b_fold


def au_loss(src_img, gen_img, w_fold, b_fold, *, num_au=NUM_AU):
    """src_img, gen_img: NCHW float32 in [0, 1].
    w_fold: (D, N_PAD) bf16, b_fold: (1, N_PAD) f32 from prepare_au_head()."""
    b_, c_, h_, w_sp = src_img.shape
    d = c_ * h_ * w_sp

    # Flatten NCHW -> (B, C*H*W) channel-major (matches the fold ordering) and
    # cast the MXU operands to bf16; accumulation stays f32 inside the kernel.
    src_flat = src_img.reshape(b_, d).astype(jnp.bfloat16)
    gen_flat = gen_img.reshape(b_, d).astype(jnp.bfloat16)

    vmem_spec = pl.BlockSpec(memory_space=pltpu.MemorySpace.VMEM)
    smem_spec = pl.BlockSpec(memory_space=pltpu.MemorySpace.SMEM)

    cost = pl.CostEstimate(
        flops=2 * (2 * b_) * d * N_PAD,              # two (B,D)x(D,N_PAD) matmuls
        transcendentals=(2 * b_) * N_PAD,            # two sigmoid passes
        bytes_accessed=(2 * b_ * d + d * N_PAD) * 2 + N_PAD * 4 + 4,
    )

    loss = pl.pallas_call(
        functools.partial(au_loss_kernel, num_au=num_au),
        out_shape=jax.ShapeDtypeStruct((1, 1), jnp.float32),
        in_specs=[vmem_spec, vmem_spec, vmem_spec, vmem_spec],
        out_specs=smem_spec,
        cost_estimate=cost,
    )(src_flat, gen_flat, w_fold, b_fold)
    return loss[0, 0]


if __name__ == "__main__":
    key = jax.random.PRNGKey(0)
    k_src, k_gen, k_w = jax.random.split(key, 3)

    # Deterministic synthetic inputs: images in [0, 1], NCHW.
    src_img = jax.random.uniform(k_src, (B, C, H, W), dtype=jnp.float32)
    gen_img = jax.random.uniform(k_gen, (B, C, H, W), dtype=jnp.float32)

    # Deterministic synthetic AU-head parameters (stand-in for frozen MEFARG).
    w = jax.random.normal(k_w, (D, NUM_AU), dtype=jnp.float32) * 0.02
    bias = jnp.zeros((1, NUM_AU), dtype=jnp.float32)

    # One-time weight-load-time fold (hoisted out of the per-call path).
    w_fold, b_fold = prepare_au_head(w, bias, C, H, W)
    w_fold = jax.block_until_ready(w_fold)
    b_fold = jax.block_until_ready(b_fold)

    loss = jax.jit(au_loss)(src_img, gen_img, w_fold, b_fold)
    jax.block_until_ready(loss)

    # Sanity: loss is a finite non-negative scalar and matches a pure-JAX ref.
    assert loss.shape == ()
    assert bool(jnp.isfinite(loss)) and float(loss) >= 0.0

    def ref_loss(s_img, g_img):
        mean_vec = jnp.repeat(jnp.asarray(IMAGENET_MEAN, jnp.float32), H * W)
        std_vec = jnp.repeat(jnp.asarray(IMAGENET_STD, jnp.float32), H * W)
        def head(img):
            x = (img.reshape(B, D) - mean_vec) / std_vec
            return jax.nn.sigmoid(x @ w + bias)
        return jnp.mean(jnp.abs(head(s_img) - head(g_img)))

    ref = ref_loss(src_img, gen_img)
    assert abs(float(loss) - float(ref)) < 1e-2, (float(loss), float(ref))

    print("KERNEL_OK")
</pallas_src>

<mosaic_0001>
module attributes {stable_mosaic.version = 11 : i64} {
  func.func @au_loss_kernel(%arg0: memref<2x768xbf16, #tpu.memory_space<vmem>>, %arg1: memref<2x768xbf16, #tpu.memory_space<vmem>>, %arg2: memref<768x128xbf16, #tpu.memory_space<vmem>>, %arg3: memref<1x128xf32, #tpu.memory_space<vmem>>, %arg4: memref<1x1xf32, #tpu.memory_space<smem>>) attributes {dimension_semantics = [], scalar_prefetch = 0 : i64, scratch_operands = 0 : i64, tpu.core_type = #tpu.core_type<tc>} {
    %c0 = arith.constant 0 : index
    %c0_0 = arith.constant 0 : index
    %0 = vector.load %arg2[%c0, %c0_0] : memref<768x128xbf16, #tpu.memory_space<vmem>>, vector<768x128xbf16>
    %c0_1 = arith.constant 0 : index
    %c0_2 = arith.constant 0 : index
    %1 = vector.load %arg3[%c0_1, %c0_2] : memref<1x128xf32, #tpu.memory_space<vmem>>, vector<1x128xf32>
    %c0_3 = arith.constant 0 : index
    %c0_4 = arith.constant 0 : index
    %2 = vector.load %arg0[%c0_3, %c0_4] : memref<2x768xbf16, #tpu.memory_space<vmem>>, vector<2x768xbf16>
    %cst = arith.constant dense<0.000000e+00> : vector<2x128xf32>
    %3 = tpu.matmul %2, %0, %cst {dimension_numbers = #tpu.dot_dimension_numbers<[1], [0], [0], [1], [0, 0, 1, 1], [], []>} : vector<2x768xbf16>, vector<768x128xbf16>, vector<2x128xf32> -> vector<2x128xf32>
    %4 = vector.broadcast %1 : vector<1x128xf32> to vector<2x128xf32>
    %5 = arith.addf %3, %4 : vector<2x128xf32>
    %6 = arith.negf %5 : vector<2x128xf32>
    %7 = math.exp %6 : vector<2x128xf32>
    %cst_5 = arith.constant 1.000000e+00 : f32
    %8 = vector.broadcast %cst_5 : f32 to vector<2x128xf32>
    %9 = arith.addf %8, %7 : vector<2x128xf32>
    %10 = arith.divf %8, %9 : vector<2x128xf32>
    %c0_6 = arith.constant 0 : index
    %c0_7 = arith.constant 0 : index
    %11 = vector.load %arg1[%c0_6, %c0_7] : memref<2x768xbf16, #tpu.memory_space<vmem>>, vector<2x768xbf16>
    %cst_8 = arith.constant dense<0.000000e+00> : vector<2x128xf32>
    %12 = tpu.matmul %11, %0, %cst_8 {dimension_numbers = #tpu.dot_dimension_numbers<[1], [0], [0], [1], [0, 0, 1, 1], [], []>} : vector<2x768xbf16>, vector<768x128xbf16>, vector<2x128xf32> -> vector<2x128xf32>
    %13 = vector.broadcast %1 : vector<1x128xf32> to vector<2x128xf32>
    %14 = arith.addf %12, %13 : vector<2x128xf32>
    %15 = arith.negf %14 : vector<2x128xf32>
    %16 = math.exp %15 : vector<2x128xf32>
    %cst_9 = arith.constant 1.000000e+00 : f32
    %17 = vector.broadcast %cst_9 : f32 to vector<2x128xf32>
    %18 = arith.addf %17, %16 : vector<2x128xf32>
    %19 = arith.divf %17, %18 : vector<2x128xf32>
    %20 = arith.subf %10, %19 : vector<2x128xf32>
    %21 = math.absf %20 : vector<2x128xf32>
    %22 = vector.shape_cast %21 : vector<2x128xf32> to vector<1x2x128xf32>
    %cst_10 = arith.constant dense<0.000000e+00> : vector<1xf32>
    %23 = vector.multi_reduction <add>, %22, %cst_10 [1, 2] : vector<1x2x128xf32> to vector<1xf32>
    %24 = vector.shape_cast %23 : vector<1xf32> to vector<1x1x1xf32>
    %25 = vector.extract %24[0, 0, 0] : f32 from vector<1x1x1xf32>
    %cst_11 = arith.constant 2.400000e+01 : f32
    %26 = arith.divf %25, %cst_11 : f32
    %c0_12 = arith.constant 0 : index
    %c0_13 = arith.constant 0 : index
    %27 = memref.load %arg4[%c0_12, %c0_13] : memref<1x1xf32, #tpu.memory_space<smem>>
    memref.store %26, %arg4[%c0_12, %c0_13] : memref<1x1xf32, #tpu.memory_space<smem>>
    return
  }
}

</mosaic_0001>

<llo_original>
// kernel: au_loss.1
$region0: #{au_loss.1}
  #allocation0 [shape = 'u32[]', space=smem, size = 0x4, offset = 0x4, fixed_abs, tag = 'smem constant byte address 0x4 - core index']
  #allocation1 [shape = 'u32[144,128]{1,0:T(1,128)}', space=vmem, size = 0x12000, scoped, tag = 'internal scratch']
  %s0 = inlined_call_operand.vmem [shape: bf16[2,768], index: 0, kind: input, shape index: {}]
  %s1 = inlined_call_operand.vmem [shape: bf16[2,768], index: 1, kind: input, shape index: {}]
  %s2 = inlined_call_operand.vmem [shape: bf16[768,128], index: 2, kind: input, shape index: {}]
  %s3 = inlined_call_operand.vmem [shape: f32[1,128], index: 3, kind: input, shape index: {}]
  %s4 = inlined_call_operand.hbm [shape: f32[1,1], index: 4, kind: output, shape index: {}]
  %s5 = sld [smem:[#allocation0]]
  $region26: #{au_loss.1} parent=0
    _
  %s7 = ssub.s32 1, %s5
  %s8 = scalar_select 0, %s7, %s5
  $region1: #{au_loss.1} parent=0
    #allocation2 [shape = 'u8[512]{0}', space=smem, size = 0x200, scoped, tag = 'output window, operand 0, single buffered']
    #allocation3 [shape = 's32[1]{0}', space=sflag, size = 0x4, scoped, tag = 'scoped memory for au_loss.1']
    %9 = vsyncpa [#allocation3], 0
    // Predicated region
    $region2: #{au_loss.1} parent=1 // pred_check
      _
    $region3: #{au_loss.1} parent=1 // pred_check_branch
      %11 = sbr.rel (0) target = $region5
    $region4: #{au_loss.1} parent=1 // pred_region
      _
    $region5: #{au_loss.1} parent=1 // pred_fallthru
      _
    // Predicated region
    $region6: #{au_loss.1} parent=1 // pred_check
      _
    $region7: #{au_loss.1} parent=1 // pred_check_branch
      %13 = sbr.rel (0) target = $region9
    $region8: #{au_loss.1} parent=1 // pred_region
      _
    $region9: #{au_loss.1} parent=1 // pred_fallthru
      _
    // Predicated region
    $region10: #{au_loss.1} parent=1 // pred_check
      _
    $region11: #{au_loss.1} parent=1 // pred_check_branch
      %15 = sbr.rel (0) target = $region13
    $region12: #{au_loss.1} parent=1 // pred_region
      _
    $region13: #{au_loss.1} parent=1 // pred_fallthru
      _
    // Predicated region
    $region14: #{au_loss.1} parent=1 // pred_check
      _
    $region15: #{au_loss.1} parent=1 // pred_check_branch
      %17 = sbr.rel (0) target = $region17
    $region16: #{au_loss.1} parent=1 // pred_region
      _
    $region17: #{au_loss.1} parent=1 // pred_fallthru
      _
    %v19 = vld [vmem:[%s2] sm:$0xf]
    %v20 = vld [vmem:[%s2 + $0x4] sm:$0xf]
    %v21 = vld [vmem:[%s2 + $0x8] sm:$0xf]
    %v22 = vld [vmem:[%s2 + $0xc] sm:$0xf]
    %v23 = vld [vmem:[%s2 + $0x10] sm:$0xf]
    %v24 = vld [vmem:[%s2 + $0x14] sm:$0xf]
    %v25 = vld [vmem:[%s2 + $0x18] sm:$0xf]
    %v26 = vld [vmem:[%s2 + $0x1c] sm:$0xf]
    %v27 = vld [vmem:[%s2 + $0x20] sm:$0xf]
    %v28 = vld [vmem:[%s2 + $0x24] sm:$0xf]
    %v29 = vld [vmem:[%s2 + $0x28] sm:$0xf]
    %v30 = vld [vmem:[%s2 + $0x2c] sm:$0xf]
    %v31 = vld [vmem:[%s2 + $0x30] sm:$0xf]
    %v32 = vld [vmem:[%s2 + $0x34] sm:$0xf]
    %v33 = vld [vmem:[%s2 + $0x38] sm:$0xf]
    %v34 = vld [vmem:[%s2 + $0x3c] sm:$0xf]
    %v35 = vld [vmem:[%s2 + $0x40] sm:$0xf]
    %v36 = vld [vmem:[%s2 + $0x44] sm:$0xf]
    %v37 = vld [vmem:[%s2 + $0x48] sm:$0xf]
    %v38 = vld [vmem:[%s2 + $0x4c] sm:$0xf]
    %v39 = vld [vmem:[%s2 + $0x50] sm:$0xf]
    %v40 = vld [vmem:[%s2 + $0x54] sm:$0xf]
    %v41 = vld [vmem:[%s2 + $0x58] sm:$0xf]
    %v42 = vld [vmem:[%s2 + $0x5c] sm:$0xf]
    %v43 = vld [vmem:[%s2 + $0x60] sm:$0xf]
    %v44 = vld [vmem:[%s2 + $0x64] sm:$0xf]
    %v45 = vld [vmem:[%s2 + $0x68] sm:$0xf]
    %v46 = vld [vmem:[%s2 + $0x6c] sm:$0xf]
    %v47 = vld [vmem:[%s2 + $0x70] sm:$0xf]
    %v48 = vld [vmem:[%s2 + $0x74] sm:$0xf]
    %v49 = vld [vmem:[%s2 + $0x78] sm:$0xf]
    %v50 = vld [vmem:[%s2 + $0x7c] sm:$0xf]
    %v51 = vld [vmem:[%s2 + $0x80] sm:$0xf]
    %v52 = vld [vmem:[%s2 + $0x84] sm:$0xf]
    %v53 = vld [vmem:[%s2 + $0x88] sm:$0xf]
    %v54 = vld [vmem:[%s2 + $0x8c] sm:$0xf]
    %v55 = vld [vmem:[%s2 + $0x90] sm:$0xf]
    %v56 = vld [vmem:[%s2 + $0x94] sm:$0xf]
    %v57 = vld [vmem:[%s2 + $0x98] sm:$0xf]
    %v58 = vld [vmem:[%s2 + $0x9c] sm:$0xf]
    %v59 = vld [vmem:[%s2 + $0xa0] sm:$0xf]
    %v60 = vld [vmem:[%s2 + $0xa4] sm:$0xf]
    %v61 = vld [vmem:[%s2 + $0xa8] sm:$0xf]
    %v62 = vld [vmem:[%s2 + $0xac] sm:$0xf]
    %v63 = vld [vmem:[%s2 + $0xb0] sm:$0xf]
    %v64 = vld [vmem:[%s2 + $0xb4] sm:$0xf]
    %v65 = vld [vmem:[%s2 + $0xb8] sm:$0xf]
    %v66 = vld [vmem:[%s2 + $0xbc] sm:$0xf]
    %v67 = vld [vmem:[%s2 + $0xc0] sm:$0xf]
    %v68 = vld [vmem:[%s2 + $0xc4] sm:$0xf]
    %v69 = vld [vmem:[%s2 + $0xc8] sm:$0xf]
    %v70 = vld [vmem:[%s2 + $0xcc] sm:$0xf]
    %v71 = vld [vmem:[%s2 + $0xd0] sm:$0xf]
    %v72 = vld [vmem:[%s2 + $0xd4] sm:$0xf]
    %v73 = vld [vmem:[%s2 + $0xd8] sm:$0xf]
    %v74 = vld [vmem:[%s2 + $0xdc] sm:$0xf]
    %v75 = vld [vmem:[%s2 + $0xe0] sm:$0xf]
    %v76 = vld [vmem:[%s2 + $0xe4] sm:$0xf]
    %v77 = vld [vmem:[%s2 + $0xe8] sm:$0xf]
    %v78 = vld [vmem:[%s2 + $0xec] sm:$0xf]
    %v79 = vld [vmem:[%s2 + $0xf0] sm:$0xf]
    %v80 = vld [vmem:[%s2 + $0xf4] sm:$0xf]
    %v81 = vld [vmem:[%s2 + $0xf8] sm:$0xf]
    %v82 = vld [vmem:[%s2 + $0xfc] sm:$0xf]
    %v83 = vld [vmem:[%s2 + $0x100] sm:$0xf]
    %v84 = vld [vmem:[%s2 + $0x104] sm:$0xf]
    %v85 = vld [vmem:[%s2 + $0x108] sm:$0xf]
    %v86 = vld [vmem:[%s2 + $0x10c] sm:$0xf]
    %v87 = vld [vmem:[%s2 + $0x110] sm:$0xf]
    %v88 = vld [vmem:[%s2 + $0x114] sm:$0xf]
    %v89 = vld [vmem:[%s2 + $0x118] sm:$0xf]
    %v90 = vld [vmem:[%s2 + $0x11c] sm:$0xf]
    %v91 = vld [vmem:[%s2 + $0x120] sm:$0xf]
    %v92 = vld [vmem:[%s2 + $0x124] sm:$0xf]
    %v93 = vld [vmem:[%s2 + $0x128] sm:$0xf]
    %v94 = vld [vmem:[%s2 + $0x12c] sm:$0xf]
    %v95 = vld [vmem:[%s2 + $0x130] sm:$0xf]
    %v96 = vld [vmem:[%s2 + $0x134] sm:$0xf]
    %v97 = vld [vmem:[%s2 + $0x138] sm:$0xf]
    %v98 = vld [vmem:[%s2 + $0x13c] sm:$0xf]
    %v99 = vld [vmem:[%s2 + $0x140] sm:$0xf]
    %v100 = vld [vmem:[%s2 + $0x144] sm:$0xf]
    %v101 = vld [vmem:[%s2 + $0x148] sm:$0xf]
    %v102 = vld [vmem:[%s2 + $0x14c] sm:$0xf]
    %v103 = vld [vmem:[%s2 + $0x150] sm:$0xf]
    %v104 = vld [vmem:[%s2 + $0x154] sm:$0xf]
    %v105 = vld [vmem:[%s2 + $0x158] sm:$0xf]
    %v106 = vld [vmem:[%s2 + $0x15c] sm:$0xf]
    %v107 = vld [vmem:[%s2 + $0x160] sm:$0xf]
    %v108 = vld [vmem:[%s2 + $0x164] sm:$0xf]
    %v109 = vld [vmem:[%s2 + $0x168] sm:$0xf]
    %v110 = vld [vmem:[%s2 + $0x16c] sm:$0xf]
    %v111 = vld [vmem:[%s2 + $0x170] sm:$0xf]
    %v112 = vld [vmem:[%s2 + $0x174] sm:$0xf]
    %v113 = vld [vmem:[%s2 + $0x178] sm:$0xf]
    %v114 = vld [vmem:[%s2 + $0x17c] sm:$0xf]
    %v115 = vld [vmem:[%s3] sm:$0x1]
    %v116 = vld [vmem:[%s0] sm:$0x3f]
    %v118 = vlaneseq
    %v119 = vshrl.u32 %v118, 7
    %v120 = vsub.s32 0, %v119
    %v121 = vrot.slane %v115, %v120
    %v124 = vcombine.high %v116, %v116
    %v126 = vunpack.c.l.s4 1966171168
    %v127 = vunpack.c.0.s8 %v126
    %v128 = vlaneseq
    %v129 = vshrl.u32 %v128, 7
    %v130 = vsub.s32 %v127, %v129
    %v131 = vrot.slane %v116, %v130
    %v133 = vunpack.c.l.s4 1966171168
    %v134 = vunpack.c.0.s8 %v133
    %v135 = vlaneseq
    %v136 = vshrl.u32 %v135, 7
    %v137 = vsub.s32 %v134, %v136
    %v138 = vrot.slane %v124, %v137
    %v139 = vcombine.high %v131, %v131
    %v140 = vcombine.high %v138, %v138
    %v142 = vunpack.c.l.s4 1966171168
    %v143 = vunpack.c.0.s8 %v142
    %v144 = vlaneseq
    %v145 = vshrl.u32 %v144, 7
    %v146 = vsub.s32 %v143, %v145
    %v147 = vrot.slane %v131, %v146
    %v149 = vunpack.c.l.s4 1966171168
    %v150 = vunpack.c.0.s8 %v149
    %v151 = vlaneseq
    %v152 = vshrl.u32 %v151, 7
    %v153 = vsub.s32 %v150, %v152
    %v154 = vrot.slane %v138, %v153
    %v156 = vunpack.c.l.s4 1966171168
    %v157 = vunpack.c.0.s8 %v156
    %v158 = vlaneseq
    %v159 = vshrl.u32 %v158, 7
    %v160 = vsub.s32 %v157, %v159
    %v161 = vrot.slane %v139, %v160
    %v163 = vunpack.c.l.s4 1966171168
    %v164 = vunpack.c.0.s8 %v163
    %v165 = vlaneseq
    %v166 = vshrl.u32 %v165, 7
    %v167 = vsub.s32 %v164, %v166
    %v168 = vrot.slane %v140, %v167
    %v169 = vcombine.high %v147, %v147
    %v170 = vcombine.high %v161, %v161
    %v273 = vunpack.c.l.b16 %v19
    %v274 = vunpack.c.l.b16 %v20
    %v275 = vunpack.c.l.b16 %v21
    %v276 = vunpack.c.l.b16 %v22
    %v277 = vunpack.c.l.b16 %v23
    %v278 = vunpack.c.l.b16 %v24
    %v279 = vunpack.c.l.b16 %v25
    %v280 = vunpack.c.l.b16 %v26
    %v281 = vunpack.c.l.b16 %v27
    %v282 = vunpack.c.l.b16 %v28
    %v283 = vunpack.c.l.b16 %v29
    %v284 = vunpack.c.l.b16 %v30
    %v285 = vunpack.c.l.b16 %v31
    %v286 = vunpack.c.l.b16 %v32
    %v287 = vunpack.c.l.b16 %v33
    %v288 = vunpack.c.l.b16 %v34
    %v289 = vunpack.c.l.b16 %v35
    %v290 = vunpack.c.l.b16 %v36
    %v291 = vunpack.c.l.b16 %v37
    %v292 = vunpack.c.l.b16 %v38
    %v293 = vunpack.c.l.b16 %v39
    %v294 = vunpack.c.l.b16 %v40
    %v295 = vunpack.c.l.b16 %v41
    %v296 = vunpack.c.l.b16 %v42
    %v297 = vunpack.c.l.b16 %v43
    %v298 = vunpack.c.l.b16 %v44
    %v299 = vunpack.c.l.b16 %v45
    %v300 = vunpack.c.l.b16 %v46
    %v301 = vunpack.c.l.b16 %v47
    %v302 = vunpack.c.l.b16 %v48
    %v303 = vunpack.c.l.b16 %v49
    %v304 = vunpack.c.l.b16 %v50
    %v305 = vunpack.c.l.b16 %v51
    %v306 = vunpack.c.l.b16 %v52
    %v307 = vunpack.c.l.b16 %v53
    %v308 = vunpack.c.l.b16 %v54
    %v309 = vunpack.c.l.b16 %v55
    %v310 = vunpack.c.l.b16 %v56
    %v311 = vunpack.c.l.b16 %v57
    %v312 = vunpack.c.l.b16 %v58
    %v313 = vunpack.c.l.b16 %v59
    %v314 = vunpack.c.l.b16 %v60
    %v315 = vunpack.c.l.b16 %v61
    %v316 = vunpack.c.l.b16 %v62
    %v317 = vunpack.c.l.b16 %v63
    %v318 = vunpack.c.l.b16 %v64
    %v319 = vunpack.c.l.b16 %v65
    %v320 = vunpack.c.l.b16 %v66
    %v321 = vunpack.c.l.b16 %v67
    %v322 = vunpack.c.l.b16 %v68
    %v323 = vunpack.c.l.b16 %v69
    %v324 = vunpack.c.l.b16 %v70
    %v325 = vunpack.c.l.b16 %v71
    %v326 = vunpack.c.l.b16 %v72
    %v327 = vunpack.c.l.b16 %v73
    %v328 = vunpack.c.l.b16 %v74
    %v329 = vunpack.c.l.b16 %v75
    %v330 = vunpack.c.l.b16 %v76
    %v331 = vunpack.c.l.b16 %v77
    %v332 = vunpack.c.l.b16 %v78
    %v333 = vunpack.c.l.b16 %v79
    %v334 = vunpack.c.l.b16 %v80
    %v335 = vunpack.c.l.b16 %v81
    %v336 = vunpack.c.l.b16 %v82
    %v337 = vunpack.c.l.b16 %v83
    %v338 = vunpack.c.l.b16 %v84
    %v339 = vunpack.c.l.b16 %v85
    %v340 = vunpack.c.l.b16 %v86
    %v341 = vunpack.c.l.b16 %v87
    %v342 = vunpack.c.l.b16 %v88
    %v343 = vunpack.c.l.b16 %v89
    %v344 = vunpack.c.l.b16 %v90
    %v345 = vunpack.c.l.b16 %v91
    %v346 = vunpack.c.l.b16 %v92
    %v347 = vunpack.c.l.b16 %v93
    %v348 = vunpack.c.l.b16 %v94
    %v349 = vunpack.c.l.b16 %v95
    %v350 = vunpack.c.l.b16 %v96
    %v351 = vunpack.c.l.b16 %v97
    %v352 = vunpack.c.l.b16 %v98
    %v353 = vunpack.c.l.b16 %v99
    %v354 = vunpack.c.l.b16 %v100
    %v355 = vunpack.c.l.b16 %v101
    %v356 = vunpack.c.l.b16 %v102
    %v357 = vunpack.c.l.b16 %v103
    %v358 = vunpack.c.l.b16 %v104
    %v359 = vunpack.c.l.b16 %v105
    %v360 = vunpack.c.l.b16 %v106
    %v361 = vunpack.c.l.b16 %v107
    %v362 = vunpack.c.l.b16 %v108
    %v363 = vunpack.c.l.b16 %v109
    %v364 = vunpack.c.l.b16 %v110
    %v365 = vunpack.c.l.b16 %v111
    %v366 = vunpack.c.l.b16 %v112
    %v367 = vunpack.c.l.b16 %v113
    %v368 = vunpack.c.l.b16 %v114
    %v369 = vpack.c.b16 %v274, %v273
    %v370 = vpack.c.b16 %v276, %v275
    %v371 = vpack.c.b16 %v278, %v277
    %v372 = vpack.c.b16 %v280, %v279
    %v373 = vpack.c.b16 %v282, %v281
    %v374 = vpack.c.b16 %v284, %v283
    %v375 = vpack.c.b16 %v286, %v285
    %v376 = vpack.c.b16 %v288, %v287
    %v377 = vpack.c.b16 %v290, %v289
    %v378 = vpack.c.b16 %v292, %v291
    %v379 = vpack.c.b16 %v294, %v293
    %v380 = vpack.c.b16 %v296, %v295
    %v381 = vpack.c.b16 %v298, %v297
    %v382 = vpack.c.b16 %v300, %v299
    %v383 = vpack.c.b16 %v302, %v301
    %v384 = vpack.c.b16 %v304, %v303
    %v385 = vpack.c.b16 %v306, %v305
    %v386 = vpack.c.b16 %v308, %v307
    %v387 = vpack.c.b16 %v310, %v309
    %v388 = vpack.c.b16 %v312, %v311
    %v389 = vpack.c.b16 %v314, %v313
    %v390 = vpack.c.b16 %v316, %v315
    %v391 = vpack.c.b16 %v318, %v317
    %v392 = vpack.c.b16 %v320, %v319
    %v393 = vpack.c.b16 %v322, %v321
    %v394 = vpack.c.b16 %v324, %v323
    %v395 = vpack.c.b16 %v326, %v325
    %v396 = vpack.c.b16 %v328, %v327
    %v397 = vpack.c.b16 %v330, %v329
    %v398 = vpack.c.b16 %v332, %v331
    %v399 = vpack.c.b16 %v334, %v333
    %v400 = vpack.c.b16 %v336, %v335
    %v401 = vpack.c.b16 %v338, %v337
    %v402 = vpack.c.b16 %v340, %v339
    %v403 = vpack.c.b16 %v342, %v341
    %v404 = vpack.c.b16 %v344, %v343
    %v405 = vpack.c.b16 %v346, %v345
    %v406 = vpack.c.b16 %v348, %v347
    %v407 = vpack.c.b16 %v350, %v349
    %v408 = vpack.c.b16 %v352, %v351
    %v409 = vpack.c.b16 %v354, %v353
    %v410 = vpack.c.b16 %v356, %v355
    %v411 = vpack.c.b16 %v358, %v357
    %v412 = vpack.c.b16 %v360, %v359
    %v413 = vpack.c.b16 %v362, %v361
    %v414 = vpack.c.b16 %v364, %v363
    %v415 = vpack.c.b16 %v366, %v365
    %v416 = vpack.c.b16 %v368, %v367
    %465 = vmatprep.subr.bf16.mxu0 0
    %466 = vmatpush1.bf16.msra.mxu0 %v369
    %467 = vmatprep.subr.bf16.mxu0 0
    %468 = vmatpush1.bf16.msra.mxu0 %v370
    %469 = vmatprep.subr.bf16.mxu0 0
    %470 = vmatpush1.bf16.msra.mxu0 %v371
    %471 = vmatprep.subr.bf16.mxu0 0
    %472 = vmatpush1.bf16.msra.mxu0 %v372
    %473 = vmatprep.subr.bf16.mxu0 0
    %474 = vmatpush1.bf16.msra.mxu0 %v373
    %475 = vmatprep.subr.bf16.mxu0 0
    %476 = vmatpush1.bf16.msra.mxu0 %v374
    %477 = vmatprep.subr.bf16.mxu0 0
    %478 = vmatpush1.bf16.msra.mxu0 %v375
    %479 = vmatprep.subr.bf16.mxu0 0
    %480 = vmatpush1.bf16.msra.mxu0 %v376
    %481 = vmatprep.subr.bf16.mxu0 0
    %482 = vmatpush1.bf16.msra.mxu0 %v377
    %483 = vmatprep.subr.bf16.mxu0 0
    %484 = vmatpush1.bf16.msra.mxu0 %v378
    %485 = vmatprep.subr.bf16.mxu0 0
    %486 = vmatpush1.bf16.msra.mxu0 %v379
    %487 = vmatprep.subr.bf16.mxu0 0
    %488 = vmatpush1.bf16.msra.mxu0 %v380
    %489 = vmatprep.subr.bf16.mxu0 0
    %490 = vmatpush1.bf16.msra.mxu0 %v381
    %491 = vmatprep.subr.bf16.mxu0 0
    %492 = vmatpush1.bf16.msra.mxu0 %v382
    %493 = vmatprep.subr.bf16.mxu0 0
    %494 = vmatpush1.bf16.msra.mxu0 %v383
    %495 = vmatprep.subr.bf16.mxu0 0
    %496 = vmatpush1.bf16.msra.mxu0 %v384
    %497 = vmatprep.mubr.bf16.mxu0 %v161
    %498 = vmatmul.mubr.bf16.gmra.mrb[0].mxu0 %v147
    %v499 = vpop.f32.mrb[0].mxu0
    %v500 = vadd.f32 %v121, %v499
    %v501 = vpop.f32.mrb[0].mxu0
    %v502 = vpop.f32.mrb[0].mxu0
    %v503 = vpop.f32.mrb[0].mxu0
    %504 = vdwg.mxu0
    %505 = vmatprep.subr.bf16.mxu0 0
    %506 = vmatpush1.bf16.msra.mxu0 %v385
    %507 = vmatprep.subr.bf16.mxu0 0
    %508 = vmatpush1.bf16.msra.mxu0 %v386
    %509 = vmatprep.subr.bf16.mxu0 0
    %510 = vmatpush1.bf16.msra.mxu0 %v387
    %511 = vmatprep.subr.bf16.mxu0 0
    %512 = vmatpush1.bf16.msra.mxu0 %v388
    %513 = vmatprep.subr.bf16.mxu0 0
    %514 = vmatpush1.bf16.msra.mxu0 %v389
    %515 = vmatprep.subr.bf16.mxu0 0
    %516 = vmatpush1.bf16.msra.mxu0 %v390
    %517 = vmatprep.subr.bf16.mxu0 0
    %518 = vmatpush1.bf16.msra.mxu0 %v391
    %519 = vmatprep.subr.bf16.mxu0 0
    %520 = vmatpush1.bf16.msra.mxu0 %v392
    %521 = vmatprep.subr.bf16.mxu0 0
    %522 = vmatpush1.bf16.msra.mxu0 %v393
    %523 = vmatprep.subr.bf16.mxu0 0
    %524 = vmatpush1.bf16.msra.mxu0 %v394
    %525 = vmatprep.subr.bf16.mxu0 0
    %526 = vmatpush1.bf16.msra.mxu0 %v395
    %527 = vmatprep.subr.bf16.mxu0 0
    %528 = vmatpush1.bf16.msra.mxu0 %v396
    %529 = vmatprep.subr.bf16.mxu0 0
    %530 = vmatpush1.bf16.msra.mxu0 %v397
    %531 = vmatprep.subr.bf16.mxu0 0
    %532 = vmatpush1.bf16.msra.mxu0 %v398
    %533 = vmatprep.subr.bf16.mxu0 0
    %534 = vmatpush1.bf16.msra.mxu0 %v399
    %535 = vmatprep.subr.bf16.mxu0 0
    %536 = vmatpush1.bf16.msra.mxu0 %v400
    %537 = vmatprep.mubr.bf16.mxu0 %v170
    %538 = vmatmul.mubr.bf16.gmra.mrb[0].mxu0 %v169
    %v539 = vpop.f32.mrb[0].mxu0
    %v540 = vadd.f32 %v500, %v539
    %v541 = vpop.f32.mrb[0].mxu0
    %v542 = vpop.f32.mrb[0].mxu0
    %v543 = vpop.f32.mrb[0].mxu0
    %544 = vdwg.mxu0
    %545 = vmatprep.subr.bf16.mxu0 0
    %546 = vmatpush1.bf16.msra.mxu0 %v401
    %547 = vmatprep.subr.bf16.mxu0 0
    %548 = vmatpush1.bf16.msra.mxu0 %v402
    %549 = vmatprep.subr.bf16.mxu0 0
    %550 = vmatpush1.bf16.msra.mxu0 %v403
    %551 = vmatprep.subr.bf16.mxu0 0
    %552 = vmatpush1.bf16.msra.mxu0 %v404
    %553 = vmatprep.subr.bf16.mxu0 0
    %554 = vmatpush1.bf16.msra.mxu0 %v405
    %555 = vmatprep.subr.bf16.mxu0 0
    %556 = vmatpush1.bf16.msra.mxu0 %v406
    %557 = vmatprep.subr.bf16.mxu0 0
    %558 = vmatpush1.bf16.msra.mxu0 %v407
    %559 = vmatprep.subr.bf16.mxu0 0
    %560 = vmatpush1.bf16.msra.mxu0 %v408
    %561 = vmatprep.subr.bf16.mxu0 0
    %562 = vmatpush1.bf16.msra.mxu0 %v409
    %563 = vmatprep.subr.bf16.mxu0 0
    %564 = vmatpush1.bf16.msra.mxu0 %v410
    %565 = vmatprep.subr.bf16.mxu0 0
    %566 = vmatpush1.bf16.msra.mxu0 %v411
    %567 = vmatprep.subr.bf16.mxu0 0
    %568 = vmatpush1.bf16.msra.mxu0 %v412
    %569 = vmatprep.subr.bf16.mxu0 0
    %570 = vmatpush1.bf16.msra.mxu0 %v413
    %571 = vmatprep.subr.bf16.mxu0 0
    %572 = vmatpush1.bf16.msra.mxu0 %v414
    %573 = vmatprep.subr.bf16.mxu0 0
    %574 = vmatpush1.bf16.msra.mxu0 %v415
    %575 = vmatprep.subr.bf16.mxu0 0
    %576 = vmatpush1.bf16.msra.mxu0 %v416
    %577 = vmatprep.mubr.bf16.mxu0 %v168
    %578 = vmatmul.mubr.bf16.gmra.mrb[0].mxu0 %v154
    %v579 = vpop.f32.mrb[0].mxu0
    %v580 = vadd.f32 %v540, %v579
    %v581 = vpop.f32.mrb[0].mxu0
    %v582 = vpop.f32.mrb[0].mxu0
    %v583 = vpop.f32.mrb[0].mxu0
    %584 = vdwg.mxu0
    %v585 = vxor.u32 %v580, 2147483648
    %v586 = vmul.f32 %v585, 1.442695
    %v587 = vpow.pop %v586
    %v588 = vadd.f32 %v587, 1.0
    %v589 = vrcp.pop %v588
    %v590 = vmul.f32 1.0, %v589
    %v591 = vld [vmem:[%s1] sm:$0x3f]
    %v593 = vcombine.high %v591, %v591
    %v595 = vunpack.c.l.s4 1966171168
    %v596 = vunpack.c.0.s8 %v595
    %v597 = vlaneseq
    %v598 = vshrl.u32 %v597, 7
    %v599 = vsub.s32 %v596, %v598
    %v600 = vrot.slane %v591, %v599
    %v602 = vunpack.c.l.s4 1966171168
    %v603 = vunpack.c.0.s8 %v602
    %v604 = vlaneseq
    %v605 = vshrl.u32 %v604, 7
    %v606 = vsub.s32 %v603, %v605
    %v607 = vrot.slane %v593, %v606
    %v608 = vcombine.high %v600, %v600
    %v609 = vcombine.high %v607, %v607
    %v611 = vunpack.c.l.s4 1966171168
    %v612 = vunpack.c.0.s8 %v611
    %v613 = vlaneseq
    %v614 = vshrl.u32 %v613, 7
    %v615 = vsub.s32 %v612, %v614
    %v616 = vrot.slane %v600, %v615
    %v618 = vunpack.c.l.s4 1966171168
    %v619 = vunpack.c.0.s8 %v618
    %v620 = vlaneseq
    %v621 = vshrl.u32 %v620, 7
    %v622 = vsub.s32 %v619, %v621
    %v623 = vrot.slane %v607, %v622
    %v625 = vunpack.c.l.s4 1966171168
    %v626 = vunpack.c.0.s8 %v625
    %v627 = vlaneseq
    %v628 = vshrl.u32 %v627, 7
    %v629 = vsub.s32 %v626, %v628
    %v630 = vrot.slane %v608, %v629
    %v632 = vunpack.c.l.s4 1966171168
    %v633 = vunpack.c.0.s8 %v632
    %v634 = vlaneseq
    %v635 = vshrl.u32 %v634, 7
    %v636 = vsub.s32 %v633, %v635
    %v637 = vrot.slane %v609, %v636
    %v638 = vcombine.high %v616, %v616
    %v639 = vcombine.high %v630, %v630
    %646 = vmatprep.subr.bf16.mxu0 0
    %647 = vmatpush1.bf16.msra.mxu0 %v369
    %648 = vmatprep.subr.bf16.mxu0 0
    %649 = vmatpush1.bf16.msra.mxu0 %v370
    %650 = vmatprep.subr.bf16.mxu0 0
    %651 = vmatpush1.bf16.msra.mxu0 %v371
    %652 = vmatprep.subr.bf16.mxu0 0
    %653 = vmatpush1.bf16.msra.mxu0 %v372
    %654 = vmatprep.subr.bf16.mxu0 0
    %655 = vmatpush1.bf16.msra.mxu0 %v373
    %656 = vmatprep.subr.bf16.mxu0 0
    %657 = vmatpush1.bf16.msra.mxu0 %v374
    %658 = vmatprep.subr.bf16.mxu0 0
    %659 = vmatpush1.bf16.msra.mxu0 %v375
    %660 = vmatprep.subr.bf16.mxu0 0
    %661 = vmatpush1.bf16.msra.mxu0 %v376
    %662 = vmatprep.subr.bf16.mxu0 0
    %663 = vmatpush1.bf16.msra.mxu0 %v377
    %664 = vmatprep.subr.bf16.mxu0 0
    %665 = vmatpush1.bf16.msra.mxu0 %v378
    %666 = vmatprep.subr.bf16.mxu0 0
    %667 = vmatpush1.bf16.msra.mxu0 %v379
    %668 = vmatprep.subr.bf16.mxu0 0
    %669 = vmatpush1.bf16.msra.mxu0 %v380
    %670 = vmatprep.subr.bf16.mxu0 0
    %671 = vmatpush1.bf16.msra.mxu0 %v381
    %672 = vmatprep.subr.bf16.mxu0 0
    %673 = vmatpush1.bf16.msra.mxu0 %v382
    %674 = vmatprep.subr.bf16.mxu0 0
    %675 = vmatpush1.bf16.msra.mxu0 %v383
    %676 = vmatprep.subr.bf16.mxu0 0
    %677 = vmatpush1.bf16.msra.mxu0 %v384
    %678 = vmatprep.mubr.bf16.mxu0 %v630
    %679 = vmatmul.mubr.bf16.gmra.mrb[0].mxu0 %v616
    %v680 = vpop.f32.mrb[0].mxu0
    %v681 = vadd.f32 %v121, %v680
    %v682 = vpop.f32.mrb[0].mxu0
    %v683 = vpop.f32.mrb[0].mxu0
    %v684 = vpop.f32.mrb[0].mxu0
    %685 = vdwg.mxu0
    %686 = vmatprep.subr.bf16.mxu0 0
    %687 = vmatpush1.bf16.msra.mxu0 %v385
    %688 = vmatprep.subr.bf16.mxu0 0
    %689 = vmatpush1.bf16.msra.mxu0 %v386
    %690 = vmatprep.subr.bf16.mxu0 0
    %691 = vmatpush1.bf16.msra.mxu0 %v387
    %692 = vmatprep.subr.bf16.mxu0 0
    %693 = vmatpush1.bf16.msra.mxu0 %v388
    %694 = vmatprep.subr.bf16.mxu0 0
    %695 = vmatpush1.bf16.msra.mxu0 %v389
    %696 = vmatprep.subr.bf16.mxu0 0
    %697 = vmatpush1.bf16.msra.mxu0 %v390
    %698 = vmatprep.subr.bf16.mxu0 0
    %699 = vmatpush1.bf16.msra.mxu0 %v391
    %700 = vmatprep.subr.bf16.mxu0 0
    %701 = vmatpush1.bf16.msra.mxu0 %v392
    %702 = vmatprep.subr.bf16.mxu0 0
    %703 = vmatpush1.bf16.msra.mxu0 %v393
    %704 = vmatprep.subr.bf16.mxu0 0
    %705 = vmatpush1.bf16.msra.mxu0 %v394
    %706 = vmatprep.subr.bf16.mxu0 0
    %707 = vmatpush1.bf16.msra.mxu0 %v395
    %708 = vmatprep.subr.bf16.mxu0 0
    %709 = vmatpush1.bf16.msra.mxu0 %v396
    %710 = vmatprep.subr.bf16.mxu0 0
    %711 = vmatpush1.bf16.msra.mxu0 %v397
    %712 = vmatprep.subr.bf16.mxu0 0
    %713 = vmatpush1.bf16.msra.mxu0 %v398
    %714 = vmatprep.subr.bf16.mxu0 0
    %715 = vmatpush1.bf16.msra.mxu0 %v399
    %716 = vmatprep.subr.bf16.mxu0 0
    %717 = vmatpush1.bf16.msra.mxu0 %v400
    %718 = vmatprep.mubr.bf16.mxu0 %v639
    %719 = vmatmul.mubr.bf16.gmra.mrb[0].mxu0 %v638
    %v720 = vpop.f32.mrb[0].mxu0
    %v721 = vadd.f32 %v681, %v720
    %v722 = vpop.f32.mrb[0].mxu0
    %v723 = vpop.f32.mrb[0].mxu0
    %v724 = vpop.f32.mrb[0].mxu0
    %725 = vdwg.mxu0
    %726 = vmatprep.subr.bf16.mxu0 0
    %727 = vmatpush1.bf16.msra.mxu0 %v401
    %728 = vmatprep.subr.bf16.mxu0 0
    %729 = vmatpush1.bf16.msra.mxu0 %v402
    %730 = vmatprep.subr.bf16.mxu0 0
    %731 = vmatpush1.bf16.msra.mxu0 %v403
    %732 = vmatprep.subr.bf16.mxu0 0
    %733 = vmatpush1.bf16.msra.mxu0 %v404
    %734 = vmatprep.subr.bf16.mxu0 0
    %735 = vmatpush1.bf16.msra.mxu0 %v405
    %736 = vmatprep.subr.bf16.mxu0 0
    %737 = vmatpush1.bf16.msra.mxu0 %v406
    %738 = vmatprep.subr.bf16.mxu0 0
    %739 = vmatpush1.bf16.msra.mxu0 %v407
    %740 = vmatprep.subr.bf16.mxu0 0
    %741 = vmatpush1.bf16.msra.mxu0 %v408
    %742 = vmatprep.subr.bf16.mxu0 0
    %743 = vmatpush1.bf16.msra.mxu0 %v409
    %744 = vmatprep.subr.bf16.mxu0 0
    %745 = vmatpush1.bf16.msra.mxu0 %v410
    %746 = vmatprep.subr.bf16.mxu0 0
    %747 = vmatpush1.bf16.msra.mxu0 %v411
    %748 = vmatprep.subr.bf16.mxu0 0
    %749 = vmatpush1.bf16.msra.mxu0 %v412
    %750 = vmatprep.subr.bf16.mxu0 0
    %751 = vmatpush1.bf16.msra.mxu0 %v413
    %752 = vmatprep.subr.bf16.mxu0 0
    %753 = vmatpush1.bf16.msra.mxu0 %v414
    %754 = vmatprep.subr.bf16.mxu0 0
    %755 = vmatpush1.bf16.msra.mxu0 %v415
    %756 = vmatprep.subr.bf16.mxu0 0
    %757 = vmatpush1.bf16.msra.mxu0 %v416
    %758 = vmatprep.mubr.bf16.mxu0 %v637
    %759 = vmatmul.mubr.bf16.gmra.mrb[0].mxu0 %v623
    %v760 = vpop.f32.mrb[0].mxu0
    %v761 = vadd.f32 %v721, %v760
    %v762 = vpop.f32.mrb[0].mxu0
    %v763 = vpop.f32.mrb[0].mxu0
    %v764 = vpop.f32.mrb[0].mxu0
    %765 = vdwg.mxu0
    %v766 = vxor.u32 %v761, 2147483648
    %v767 = vmul.f32 %v766, 1.442695
    %v768 = vpow.pop %v767
    %v769 = vadd.f32 %v768, 1.0
    %v770 = vrcp.pop %v769
    %v771 = vmul.f32 1.0, %v770
    %v772 = vsub.f32 %v590, %v771
    %v773 = vand.u32 2147483647, %v772
    %vm774 = vcmask 1041408
    %v775 = vsel %vm774, %v773, 0.0
    %776 = vadd.xlane.f32.xlu0 %v775
    %v777 = vpop.xlane.xlu0 %776
    %v778 = vrot.slane %v777, 4
    %v779 = vadd.f32 %v777, %v778
    %v780 = vrot.slane %v779, 2
    %v781 = vadd.f32 %v779, %v780
    %v782 = vrot.slane %v781, 1
    %v783 = vadd.f32 %v781, %v782
    %s784 = vtos %v783
    %v785 = vrcp.pop 24.0
    %s786 = vtos %v785
    %s787 = smul.f32 %s784, %s786
    %s788 = scalar_lea.smem [#allocation2], 0
    %789 = sst [smem:[%s788]] %s787
    // Predicated region
    $region18: #{au_loss.1} parent=1 // pred_check
      _
    $region19: #{au_loss.1} parent=1 // pred_check_branch
      %791 = sbr.rel (0) target = $region21
    $region20: #{au_loss.1} parent=1 // pred_region
      %s793 = ssub.s32 16, 16
      %794 = vsyncadd [#allocation3], %s793
      %797 = dma.smem_to_hbm [#allocation2], 16, %s4, [#allocation3]
    $region21: #{au_loss.1} parent=1 // pred_fallthru
      _
    // Predicated region
    $region22: #{au_loss.1} parent=1 // pred_check
      _
    $region23: #{au_loss.1} parent=1 // pred_check_branch
      %799 = sbr.rel (0) target = $region25
    $region24: #{au_loss.1} parent=1 // pred_region
      %800 = dma.done [#allocation3], 16
    $region25: #{au_loss.1} parent=1 // pred_fallthru
      _
    %801 = sfence
    %802 = vsyncpa [#allocation3], 1

</llo_original>
